<compile_context>
chip_gen: v5e
topology: v5e:2x2
jax: 0.10.0
libtpu: 0.0.40
codegen_flags: <defaults>
</compile_context>

<pallas_src>
import functools

import jax
import jax.numpy as jnp
from jax.experimental import pallas as pl
from jax.experimental.pallas import tpu as pltpu


def _embed_kernel(p_ref, w_ref, pos_ref, o_ref):
    # p_ref:   (T, Kp) bf16  token rows of one image (row 0 all-zero -> class-token slot)
    # w_ref:   (Kp, E) bf16  conv weight as matmul operand; constant block index -> VMEM resident
    # pos_ref: (T, E)  f32   per-row additive term; constant block index -> VMEM resident
    # o_ref:   (T, E)  f32
    y = jnp.dot(p_ref[...], w_ref[...], preferred_element_type=jnp.float32)
    o_ref[...] = (y + pos_ref[...]).astype(o_ref.dtype)


def embedding_forward(x, conv_w, conv_b, class_token, position_embedding, patch_size):
    """ViT embedding forward.

    x:                  (B, C, H, W)        float32 NCHW (PyTorch layout)
    conv_w:             (E, C, p, p)        Conv2d weight
    conv_b:             (E,)                Conv2d bias
    class_token:        (1, 1, E)
    position_embedding: (1, n_patches+1, E)
    returns:            (B, n_patches+1, E) float32
    """
    B, C, H, W = x.shape
    E = conv_w.shape[0]
    p = patch_size
    Hp, Wp = H // p, W // p
    n_patches = Hp * Wp
    K = C * p * p
    Kp = ((K + 127) // 128) * 128        # zero-pad K to a lane-aligned multiple of 128
    T = n_patches + 1                    # tokens per image (class token + patches)

    # im2col: (B, C, H, W) -> (B, n_patches, K), c-major then (ph, pw) — matches Conv2d weight
    # flattening.  transpose + pad + cast form a single copy fusion in XLA.
    patches = x.reshape(B, C, Hp, p, Wp, p).transpose(0, 2, 4, 1, 3, 5)
    patches = patches.reshape(B, n_patches, K)
    # Prepend one all-zero row per image (class-token slot; its matmul result is exactly 0) and
    # zero-pad K -> Kp in the same jnp.pad (exact: padded columns meet zero-padded weight rows).
    patches = jnp.pad(patches, ((0, 0), (1, 0), (0, Kp - K))).astype(jnp.bfloat16)  # (B, T, Kp)

    # Conv2d as matmul: (E, C, p, p) -> (K, E) -> zero-pad to (Kp, E), bf16 operand.
    w_mat = jnp.pad(conv_w.reshape(E, K), ((0, 0), (0, Kp - K))).T.astype(jnp.bfloat16)

    # Resident per-row additive term (T, E) f32: row 0 = class_token + pos[0];
    # rows 1.. = pos + conv bias.  (E should be a multiple of 128 for unmasked lane-dense stores.)
    pos = position_embedding[0]                                            # (T, E)
    pos_adj = jnp.concatenate(
        [pos[0:1] + class_token[0], pos[1:] + conv_b[None, :]], axis=0)    # (T, E)

    cost = pl.CostEstimate(
        flops=2 * B * T * Kp * E,
        transcendentals=0,
        # patches (read) + weight (read once) + pos (read once) + output (write)
        bytes_accessed=B * T * Kp * 2 + Kp * E * 2 + T * E * 4 + B * T * E * 4,
    )

    # VMEM budget: double-buffered patches/output, weight+pos counted double-buffered for headroom.
    vmem_bytes = 2 * (T * Kp * 2 + Kp * E * 2 + T * E * 4 + T * E * 4)
    vmem_limit = int(min(max(vmem_bytes + (4 << 20), 32 << 20), 64 << 20))

    out = pl.pallas_call(
        _embed_kernel,
        out_shape=jax.ShapeDtypeStruct((B, T, E), jnp.float32),
        grid=(B,),
        in_specs=[
            pl.BlockSpec((None, T, Kp), lambda b: (b, 0, 0)),   # per-image token rows
            pl.BlockSpec((Kp, E), lambda b: (0, 0)),            # weight: resident in VMEM
            pl.BlockSpec((T, E), lambda b: (0, 0)),             # pos/cls/bias: resident in VMEM
        ],
        out_specs=pl.BlockSpec((None, T, E), lambda b: (b, 0, 0)),
        compiler_params=pltpu.CompilerParams(
            dimension_semantics=("parallel",),                  # images independent -> megacore
            allow_input_fusion=[True, True, True],
            vmem_limit_bytes=vmem_limit,
        ),
        cost_estimate=cost,
    )(patches, w_mat, pos_adj)

    return out


if __name__ == "__main__":
    # Small shapes consistent with the module: image 32x32, patch 8 -> 16 patches, E=128.
    B, C, IMG, P, E = 2, 3, 32, 8, 128
    n_patches = (IMG // P) ** 2

    key = jax.random.PRNGKey(0)
    k_x, k_w, k_b, k_cls, k_pos = jax.random.split(key, 5)

    x = jax.random.normal(k_x, (B, C, IMG, IMG), dtype=jnp.float32)
    conv_w = jax.random.normal(k_w, (E, C, P, P), dtype=jnp.float32) * 0.02
    conv_b = jax.random.normal(k_b, (E,), dtype=jnp.float32) * 0.02
    class_token = jax.random.normal(k_cls, (1, 1, E), dtype=jnp.float32)
    position_embedding = jax.random.normal(k_pos, (1, n_patches + 1, E), dtype=jnp.float32)

    fwd = jax.jit(functools.partial(embedding_forward, patch_size=P))
    out = jax.block_until_ready(fwd(x, conv_w, conv_b, class_token, position_embedding))

    # Reference (pure f32): conv -> flatten -> mT -> cat(class token) -> + position embedding.
    conv = jax.lax.conv_general_dilated(
        x, conv_w, window_strides=(P, P), padding="VALID",
        dimension_numbers=("NCHW", "OIHW", "NCHW"),
    ) + conv_b.reshape(1, E, 1, 1)
    ref_patches = conv.reshape(B, E, n_patches).transpose(0, 2, 1)
    ref = jnp.concatenate(
        [jnp.broadcast_to(class_token, (B, 1, E)), ref_patches], axis=1
    ) + position_embedding

    assert out.shape == (B, n_patches + 1, E)
    # bf16 matmul operands (f32 accumulation) -> loosened tolerance vs f32 reference.
    assert jnp.allclose(out, ref, atol=2e-2, rtol=2e-2)
    # Class-token rows involve no matmul contribution and must match exactly in f32.
    assert jnp.allclose(out[:, 0, :], ref[:, 0, :], atol=1e-6, rtol=1e-6)

    print("KERNEL_OK")
</pallas_src>

<mosaic_0001>
module attributes {stable_mosaic.version = 11 : i64} {
  func.func @_embed_kernel(%arg0: i32, %arg1: memref<1x17x256xbf16, #tpu.memory_space<vmem>>, %arg2: memref<256x128xbf16, #tpu.memory_space<vmem>>, %arg3: memref<17x128xf32, #tpu.memory_space<vmem>>, %arg4: memref<1x17x128xf32, #tpu.memory_space<vmem>>) attributes {dimension_semantics = [#tpu.dimension_semantics<parallel>], iteration_bounds = array<i64: 2>, scalar_prefetch = 0 : i64, scratch_operands = 0 : i64, tpu.core_type = #tpu.core_type<tc>, window_params = [{transform_indices = @transform_0, window_bounds = array<i64: 1, 17, 256>}, {pipeline_mode = #tpu.pipeline_mode<synchronous>, transform_indices = @transform_1, window_bounds = array<i64: 256, 128>}, {pipeline_mode = #tpu.pipeline_mode<synchronous>, transform_indices = @transform_2, window_bounds = array<i64: 17, 128>}, {transform_indices = @transform_3, window_bounds = array<i64: 1, 17, 128>}]} {
    %c0 = arith.constant 0 : index
    %c0_0 = arith.constant 0 : index
    %c0_1 = arith.constant 0 : index
    %0 = vector.load %arg1[%c0, %c0_0, %c0_1] : memref<1x17x256xbf16, #tpu.memory_space<vmem>>, vector<1x17x256xbf16>
    %1 = vector.shape_cast %0 : vector<1x17x256xbf16> to vector<17x256xbf16>
    %c0_2 = arith.constant 0 : index
    %c0_3 = arith.constant 0 : index
    %2 = vector.load %arg2[%c0_2, %c0_3] : memref<256x128xbf16, #tpu.memory_space<vmem>>, vector<256x128xbf16>
    %cst = arith.constant dense<0.000000e+00> : vector<17x128xf32>
    %3 = tpu.matmul %1, %2, %cst {dimension_numbers = #tpu.dot_dimension_numbers<[1], [0], [0], [1], [0, 0, 1, 1], [], []>} : vector<17x256xbf16>, vector<256x128xbf16>, vector<17x128xf32> -> vector<17x128xf32>
    %c0_4 = arith.constant 0 : index
    %c0_5 = arith.constant 0 : index
    %4 = vector.load %arg3[%c0_4, %c0_5] : memref<17x128xf32, #tpu.memory_space<vmem>>, vector<17x128xf32>
    %5 = arith.addf %3, %4 : vector<17x128xf32>
    %c0_6 = arith.constant 0 : index
    %c0_7 = arith.constant 0 : index
    %c0_8 = arith.constant 0 : index
    %6 = vector.load %arg4[%c0_6, %c0_7, %c0_8] : memref<1x17x128xf32, #tpu.memory_space<vmem>>, vector<1x17x128xf32>
    %7 = vector.shape_cast %6 : vector<1x17x128xf32> to vector<17x128xf32>
    %8 = vector.shape_cast %5 : vector<17x128xf32> to vector<1x17x128xf32>
    tpu.vector_store %arg4[%c0_6, %c0_7, %c0_8], %8 {strides = array<i32>} : memref<1x17x128xf32, #tpu.memory_space<vmem>>, vector<1x17x128xf32>,
    return
  }
  func.func @transform_0(%arg0: i32) -> (i32, i32, i32) {
    %c0_i32 = arith.constant 0 : i32
    %c0_i32_0 = arith.constant 0 : i32
    %c0_i32_1 = arith.constant 0 : i32
    return %arg0, %c0_i32, %c0_i32_0 : i32, i32, i32
  }
  func.func @transform_1(%arg0: i32) -> (i32, i32) {
    %c0_i32 = arith.constant 0 : i32
    %c0_i32_0 = arith.constant 0 : i32
    %c0_i32_1 = arith.constant 0 : i32
    return %c0_i32, %c0_i32_0 : i32, i32
  }
  func.func @transform_2(%arg0: i32) -> (i32, i32) {
    %c0_i32 = arith.constant 0 : i32
    %c0_i32_0 = arith.constant 0 : i32
    %c0_i32_1 = arith.constant 0 : i32
    return %c0_i32, %c0_i32_0 : i32, i32
  }
  func.func @transform_3(%arg0: i32) -> (i32, i32, i32) {
    %c0_i32 = arith.constant 0 : i32
    %c0_i32_0 = arith.constant 0 : i32
    %c0_i32_1 = arith.constant 0 : i32
    return %arg0, %c0_i32, %c0_i32_0 : i32, i32, i32
  }
}

</mosaic_0001>

<llo_original>
// kernel: embedding_forward.2
$region0: #{embedding_forward.2}
  #allocation0 [shape = 'u32[]', space=smem, size = 0x4, offset = 0x4, fixed_abs, tag = 'smem constant byte address 0x4 - core index']
  #allocation1 [shape = 'u32[72,128]{1,0:T(1,128)}', space=vmem, size = 0x9000, scoped, tag = 'internal scratch']
  #allocation2 [shape = 'u32[2048]{0}', space=vmem, size = 0x2000, scoped, tag = 'scoped memory for embedding_forward.2']
  #allocation3 [shape = 'u32[2048]{0}', space=vmem, size = 0x2000, scoped, tag = 'scoped memory for embedding_forward.2']
  #allocation4 [shape = 'u32[2048]{0}', space=vmem, size = 0x2000, scoped, tag = 'scoped memory for embedding_forward.2']
  #allocation5 [shape = 'u32[2048]{0}', space=vmem, size = 0x2000, scoped, tag = 'scoped memory for embedding_forward.2']
  #allocation6 [shape = 'u32[2048]{0}', space=vmem, size = 0x2000, scoped, tag = 'scoped memory for embedding_forward.2']
  #allocation7 [shape = 'u32[2048]{0}', space=vmem, size = 0x2000, scoped, tag = 'scoped memory for embedding_forward.2']
  #allocation8 [shape = 'u32[2048]{0}', space=vmem, size = 0x2000, scoped, tag = 'scoped memory for embedding_forward.2']
  #allocation9 [shape = 'u32[2048]{0}', space=vmem, size = 0x2000, scoped, tag = 'scoped memory for embedding_forward.2']
  #allocation10 [shape = 'u32[2048]{0}', space=vmem, size = 0x2000, scoped, tag = 'scoped memory for embedding_forward.2']
  #allocation11 [shape = 'u32[2048]{0}', space=vmem, size = 0x2000, scoped, tag = 'scoped memory for embedding_forward.2']
  #allocation12 [shape = 'u32[2048]{0}', space=vmem, size = 0x2000, scoped, tag = 'scoped memory for embedding_forward.2']
  #allocation13 [shape = 'u32[2048]{0}', space=vmem, size = 0x2000, scoped, tag = 'scoped memory for embedding_forward.2']
  #allocation14 [shape = 'u32[2048]{0}', space=vmem, size = 0x2000, scoped, tag = 'scoped memory for embedding_forward.2']
  #allocation15 [shape = 'u32[2048]{0}', space=vmem, size = 0x2000, scoped, tag = 'scoped memory for embedding_forward.2']
  #allocation16 [shape = 'u32[2048]{0}', space=vmem, size = 0x2000, scoped, tag = 'scoped memory for embedding_forward.2']
  #allocation17 [shape = 'u32[2048]{0}', space=vmem, size = 0x2000, scoped, tag = 'scoped memory for embedding_forward.2']
  #allocation18 [shape = 'u32[2048]{0}', space=vmem, size = 0x2000, scoped, tag = 'scoped memory for embedding_forward.2']
  #allocation19 [shape = 'u32[2048]{0}', space=vmem, size = 0x2000, scoped, tag = 'scoped memory for embedding_forward.2']
  #allocation20 [shape = 'u32[2048]{0}', space=vmem, size = 0x2000, scoped, tag = 'scoped memory for embedding_forward.2']
  #allocation21 [shape = 'u32[2048]{0}', space=vmem, size = 0x2000, scoped, tag = 'scoped memory for embedding_forward.2']
  %s0 = inlined_call_operand.vmem [shape: bf16[128,192], index: 0, kind: input, shape index: {}]
  %s1 = inlined_call_operand.<no memory space> [shape: bf16[], index: 1, kind: input, shape index: {}]
  %s2 = inlined_call_operand.vmem [shape: bf16[2,16,192], index: 2, kind: input, shape index: {}]
  %s3 = inlined_call_operand.vmem [shape: f32[16,128], index: 3, kind: input, shape index: {}]
  %s4 = inlined_call_operand.<no memory space> [shape: f32[], index: 4, kind: input, shape index: {}]
  %s5 = inlined_call_operand.vmem [shape: f32[1,128], index: 5, kind: input, shape index: {}]
  %s6 = inlined_call_operand.vmem [shape: f32[2,17,128], index: 6, kind: output, shape index: {}]
  %s7 = sld [smem:[#allocation0]]
  $region49: #{embedding_forward.2} parent=0
    _
  %s9 = ssub.s32 1, %s7
  %s10 = scalar_select 0, %s9, %s7
  %v11 = vstv %s1
  %v12 = vunpack.i.l.bf16 %v11
  %v14 = vunpack.i.h.bf16 %v11
  %v16 = vstv %s1
  %v17 = vunpack.i.l.bf16 %v16
  %v19 = vunpack.i.h.bf16 %v16
  %v21 = vstv %s4
  %v22 = vstv %s4
  loop: start=0, step=1, limit=4
  $region2: #{embedding_forward.2} parent=0 // loop_pre_header
    _
  $region3: #{embedding_forward.2} parent=0 // loop_header
    %s24 = sphi 0, %s28
    %p25 = scmp.ge.s32.totalorder %s24, 4
    %s34 = sphi 0, %s36
    %s37 = sphi 0, %s34
    %s38 = sphi 0, %s37
    %s54 = sphi 0, %s38
    %s58 = sphi 0, %s58
    %s60 = sphi 0, %s58
    %s61 = sphi 0, %s60
    %s75 = sphi 0, %s61
    %s79 = sphi 0, %s79
    %s81 = sphi 0, %s79
    %s82 = sphi 0, %s81
    %s96 = sphi 0, %s82
    %s100 = sphi 0, %s100
    %s102 = sphi 0, %s100
    %s103 = sphi 0, %s102
    %s117 = sphi 0, %s103
    %s123 = sphi 0, %s125
    %s126 = sphi 0, %s123
    %s127 = sphi 0, %s126
    %s143 = sphi 0, %s127
  $region4: #{embedding_forward.2} parent=0 // loop_header_branch
    %27 = sbr.rel (%p25) target = $region8
  $region5: #{embedding_forward.2} parent=0 // loop_body
    %s29 = ssub.s32 %s24, 1
    %s30 = ssub.s32 %s24, 2
    %s31 = sadd.s32 %s24, 1
    %s32 = ssub.s32 %s24, %s31
    %p33 = scmp.eq.s32.totalorder %s32, 0
    %s35 = sadd.s32 %s34, 1
    %s36 = scalar_select %p33, %s34, %s35
    %p39 = pneg %p33
    %p40 = scmp.eq.s32.totalorder %s24, 1
    %p41 = por %p39, %p40
    %p42 = scmp.ne.s32.totalorder %s34, %s37
    %p43 = scmp.eq.s32.totalorder %s24, 0
    %p44 = por %p42, %p43
    %p45 = scmp.ne.s32.totalorder %s34, %s37
    %p46 = scmp.eq.s32.totalorder %s29, 1
    %p47 = por %p45, %p46
    %p48 = scmp.ne.s32.totalorder %s37, %s38
    %p49 = scmp.eq.s32.totalorder %s29, 0
    %p50 = por %p48, %p49
    %p51 = scmp.ne.s32.totalorder %s37, %s38
    %p52 = scmp.eq.s32.totalorder %s30, 1
    %p53 = por %p51, %p52
    %p55 = scmp.ne.s32.totalorder %s38, %s54
    %p56 = scmp.eq.s32.totalorder %s30, 0
    %p57 = por %p55, %p56
    %s59 = sadd.s32 %s58, 1
    %p62 = scmp.eq.s32.totalorder %s24, 1
    %p63 = scmp.ne.s32.totalorder %s58, %s60
    %p64 = scmp.eq.s32.totalorder %s24, 0
    %p65 = por %p63, %p64
    %p66 = scmp.ne.s32.totalorder %s58, %s60
    %p67 = scmp.eq.s32.totalorder %s29, 1
    %p68 = por %p66, %p67
    %p69 = scmp.ne.s32.totalorder %s60, %s61
    %p70 = scmp.eq.s32.totalorder %s29, 0
    %p71 = por %p69, %p70
    %p72 = scmp.ne.s32.totalorder %s60, %s61
    %p73 = scmp.eq.s32.totalorder %s30, 1
    %p74 = por %p72, %p73
    %p76 = scmp.ne.s32.totalorder %s61, %s75
    %p77 = scmp.eq.s32.totalorder %s30, 0
    %p78 = por %p76, %p77
    %s80 = sadd.s32 %s79, 1
    %p83 = scmp.eq.s32.totalorder %s24, 1
    %p84 = scmp.ne.s32.totalorder %s79, %s81
    %p85 = scmp.eq.s32.totalorder %s24, 0
    %p86 = por %p84, %p85
    %p87 = scmp.ne.s32.totalorder %s79, %s81
    %p88 = scmp.eq.s32.totalorder %s29, 1
    %p89 = por %p87, %p88
    %p90 = scmp.ne.s32.totalorder %s81, %s82
    %p91 = scmp.eq.s32.totalorder %s29, 0
    %p92 = por %p90, %p91
    %p93 = scmp.ne.s32.totalorder %s81, %s82
    %p94 = scmp.eq.s32.totalorder %s30, 1
    %p95 = por %p93, %p94
    %p97 = scmp.ne.s32.totalorder %s82, %s96
    %p98 = scmp.eq.s32.totalorder %s30, 0
    %p99 = por %p97, %p98
    %s101 = sadd.s32 %s100, 1
    %p104 = scmp.eq.s32.totalorder %s24, 1
    %p105 = scmp.ne.s32.totalorder %s100, %s102
    %p106 = scmp.eq.s32.totalorder %s24, 0
    %p107 = por %p105, %p106
    %p108 = scmp.ne.s32.totalorder %s100, %s102
    %p109 = scmp.eq.s32.totalorder %s29, 1
    %p110 = por %p108, %p109
    %p111 = scmp.ne.s32.totalorder %s102, %s103
    %p112 = scmp.eq.s32.totalorder %s29, 0
    %p113 = por %p111, %p112
    %p114 = scmp.ne.s32.totalorder %s102, %s103
    %p115 = scmp.eq.s32.totalorder %s30, 1
    %p116 = por %p114, %p115
    %p118 = scmp.ne.s32.totalorder %s103, %s117
    %p119 = scmp.eq.s32.totalorder %s30, 0
    %p120 = por %p118, %p119
    %s121 = ssub.s32 %s24, %s31
    %p122 = scmp.eq.s32.totalorder %s121, 0
    %s124 = sadd.s32 %s123, 1
    %s125 = scalar_select %p122, %s123, %s124
    %p128 = pneg %p122
    %p129 = scmp.eq.s32.totalorder %s24, 1
    %p130 = por %p128, %p129
    %p131 = scmp.ne.s32.totalorder %s123, %s126
    %p132 = scmp.eq.s32.totalorder %s24, 0
    %p133 = por %p131, %p132
    %p134 = scmp.ne.s32.totalorder %s123, %s126
    %p135 = scmp.eq.s32.totalorder %s29, 1
    %p136 = por %p134, %p135
    %p137 = scmp.ne.s32.totalorder %s126, %s127
    %p138 = scmp.eq.s32.totalorder %s29, 0
    %p139 = por %p137, %p138
    %p140 = scmp.ne.s32.totalorder %s126, %s127
    %p141 = scmp.eq.s32.totalorder %s30, 1
    %p142 = por %p140, %p141
    %p144 = scmp.ne.s32.totalorder %s127, %s143
    %p145 = scmp.eq.s32.totalorder %s30, 0
    %p146 = por %p144, %p145
    %p147 = scmp.le.s32.totalorder 1, %s24
    %p148 = scmp.lt.s32.totalorder %s24, 3
    %p149 = pnand %p147, %p148
    %p150 = pneg %p149
    // Predicated region
    $region9: #{embedding_forward.2} parent=5 // pred_check
      _
    $region10: #{embedding_forward.2} parent=5 // pred_check_branch
      %152 = sbr.rel (%p149) target = $region12
    $region11: #{embedding_forward.2} parent=5 // pred_region
      %s153 = ssub.s32 %s24, 1
      // Predicated region
      $region13: #{embedding_forward.2} parent=11 // pred_check
        %p154 = pneg %p71
      $region14: #{embedding_forward.2} parent=11 // pred_check_branch
        %156 = sbr.rel (%p154) target = $region16
      $region15: #{embedding_forward.2} parent=11 // pred_region
        _
      $region16: #{embedding_forward.2} parent=11 // pred_fallthru
        _
      // Predicated region
      $region17: #{embedding_forward.2} parent=11 // pred_check
        %p157 = pneg %p92
      $region18: #{embedding_forward.2} parent=11 // pred_check_branch
        %159 = sbr.rel (%p157) target = $region20
      $region19: #{embedding_forward.2} parent=11 // pred_region
        %s160 = scalar_lea.vmem %s3, 4294967288
      $region20: #{embedding_forward.2} parent=11 // pred_fallthru
        _
      // Predicated region
      $region21: #{embedding_forward.2} parent=11 // pred_check
        %p161 = pneg %p113
      $region22: #{embedding_forward.2} parent=11 // pred_check_branch
        %163 = sbr.rel (%p161) target = $region24
      $region23: #{embedding_forward.2} parent=11 // pred_region
        _
      $region24: #{embedding_forward.2} parent=11 // pred_fallthru
        _
    $region12: #{embedding_forward.2} parent=5 // pred_fallthru
      _
    %p164 = scmp.lt.s32.totalorder %s24, 2
    // Predicated region
    $region25: #{embedding_forward.2} parent=5 // pred_check
      %p165 = pneg %p164
    $region26: #{embedding_forward.2} parent=5 // pred_check_branch
      %167 = sbr.rel (%p165) target = $region28
    $region27: #{embedding_forward.2} parent=5 // pred_region
      // Predicated region
      $region29: #{embedding_forward.2} parent=27 // pred_check
        %p168 = pneg %p44
      $region30: #{embedding_forward.2} parent=27 // pred_check_branch
        %170 = sbr.rel (%p168) target = $region32
      $region31: #{embedding_forward.2} parent=27 // pred_region
        %p171 = scmp.lt.s32.totalorder %s24, 1
        %s172 = scalar_select %p171, %s24, 1
        %s173 = smul.addr %s172, 4
        %s174 = sadd.s32 4294967294, %s173
        %s175 = smul.addr %s174, 4
        %s176 = scalar_lea.vmem %s2, %s175
      $region32: #{embedding_forward.2} parent=27 // pred_fallthru
        _
    $region28: #{embedding_forward.2} parent=5 // pred_fallthru
      _
    %p177 = scmp.le.s32.totalorder 1, %s24
    %p178 = scmp.lt.s32.totalorder %s24, 3
    %p179 = pnand %p177, %p178
    %p180 = pneg %p179
    // Predicated region
    $region33: #{embedding_forward.2} parent=5 // pred_check
      _
    $region34: #{embedding_forward.2} parent=5 // pred_check_branch
      %182 = sbr.rel (%p179) target = $region36
    $region35: #{embedding_forward.2} parent=5 // pred_region
      #allocation22 [shape = 'u8[12288]{0}', space=vmem, size = 0x3000, dematerialized = true, scoped, tag = 'FusionAdapter Buffer %fusion.3 = bf16[2,17,256]{2,1,0:T(8,128)(2,1)} fusion(%param_2.4, %param_1.7), kind=kLoop, calls=%fused_computation.4.clone, metadata={op_name="jit(embedding_forward)/jit(_pad)/pad" stack_frame_id=9}']
      #allocation23 [shape = 'u8[65536]{0}', space=vmem, size = 0x10000, dematerialized = true, scoped, tag = 'FusionAdapter Buffer %fusion.1 = bf16[256,128]{1,0:T(8,128)(2,1)} fusion(%param_0.9, %param_1.7), kind=kLoop, calls=%fused_computation.2.clone, metadata={op_name="jit(embedding_forward)/convert_element_type" stack_frame_id=13}']
      #allocation24 [shape = 'u8[12288]{0}', space=vmem, size = 0x3000, dematerialized = true, scoped, tag = 'FusionAdapter Buffer %fusion.4 = f32[17,128]{1,0:T(8,128)} fusion(%param_3.3, %param_4.2, %param_5.1), kind=kLoop, calls=%fused_computation.5.clone, metadata={op_name="jit(embedding_forward)/concatenate" stack_frame_id=19}']
      %s183 = ssub.s32 %s24, 1
      %p184 = scmp.lt.s32.totalorder %s29, 1
      %s185 = scalar_select %p184, %s29, 1
      %s186 = smul.addr %s185, 4
      %s187 = sadd.s32 4294967294, %s186
      %s188 = smul.addr %s187, 4
      %s189 = scalar_lea.vmem %s2, %s188
      %p190 = pneg %p50
      %p191 = pneg %p47
      %p192 = pneg %p71
      %p193 = pneg %p68
      %s194 = scalar_lea.vmem %s3, 4294967288
      %p195 = pneg %p92
      %p196 = pneg %p89
      %p197 = pneg %p113
      %p198 = pneg %p110
      %p199 = pneg %p139
      %p200 = pneg %p136
      %p201 = scmp.lt.s32.totalorder %s29, 1
      %s202 = scalar_select %p201, %s29, 1
      %s203 = smul.addr %s202, 3
      %s204 = smul.addr %s203, 8
      %s205 = scalar_lea.vmem %s6, %s204
      %p206 = scmp.lt.s32.totalorder %s29, 1
      %s207 = scalar_select %p206, %s29, 1
      %s208 = smul.addr %s207, 4
      %s209 = sadd.s32 4294967294, %s208
      %s210 = smul.addr %s209, 4
      %s211 = scalar_lea.vmem %s2, %s210
      %s212 = scalar_lea.vmem %s3, 4294967288
      %p213 = scmp.lt.s32.totalorder %s29, 1
      %s214 = scalar_select %p213, %s29, 1
      %s215 = smul.addr %s214, 3
      %s216 = smul.addr %s215, 8
      %s217 = scalar_lea.vmem %s6, %s216
      %s219 = sand.u32 0, 85
      %s220 = sshrl.u32 %s219, 1
      %s221 = sor.u32 %s219, %s220
      %s222 = sand.u32 51, %s221
      %s223 = sshrl.u32 %s222, 2
      %s224 = sor.u32 %s222, %s223
      %s225 = sand.u32 15, %s224
      %v226 = vld [vmem:[%s211] sm:%s225]
      %v227 = vunpack.c.l.bf16 %v226
      %v228 = vunpack.c.h.bf16 %v226
      %s229 = scalar_lea.vmem %s211, 8
      %v230 = vld [vmem:[%s229] sm:$0xf]
      %v231 = vunpack.c.l.bf16 %v230
      %v232 = vunpack.c.h.bf16 %v230
      %v233 = vlaneseq
      %v234 = vand.u32 %v233, 127
      %vm236 = vcmp.lt.s32.totalorder %v234, 192
      %v237 = vsel %vm236, %v231, %v12
      %vm238 = vcmask 1046528
      %v239 = vsel %vm238, %v237, %v12
      %v240 = vrot.slane %v239, 7
      %v241 = vpack.c.bf16 0.0, %v240
      %s243 = ssub.s32 16, 1
      %244 = vst [vmem:[#allocation22] sm:%s243] %v241
      %s245 = scalar_lea.vmem %s211, 4
      %s247 = sand.u32 0, 85
      %s248 = sshrl.u32 %s247, 1
      %s249 = sor.u32 %s247, %s248
      %s250 = sand.u32 51, %s249
      %s251 = sshrl.u32 %s250, 2
      %s252 = sor.u32 %s250, %s251
      %s253 = sand.u32 15, %s252
      %v254 = vld [vmem:[%s245] sm:%s253]
      %v255 = vunpack.c.l.bf16 %v254
      %v256 = vunpack.c.h.bf16 %v254
      %s257 = scalar_lea.vmem %s211, 12
      %s259 = sor.u32 255, 127
      %s260 = sand.u32 %s259, 85
      %s261 = sshrl.u32 %s260, 1
      %s262 = sor.u32 %s260, %s261
      %s263 = sand.u32 51, %s262
      %s264 = sshrl.u32 %s263, 2
      %s265 = sor.u32 %s263, %s264
      %s266 = sand.u32 15, %s265
      %v267 = vld [vmem:[%s257] sm:%s266]
      %v268 = vunpack.c.l.bf16 %v267
      %v269 = vunpack.c.h.bf16 %v267
      %v270 = vlaneseq
      %v271 = vand.u32 %v270, 127
      %v272 = vadd.s32 %v271, 128
      %vm273 = vcmp.lt.s32.totalorder %v272, 192
      %v274 = vsel %vm273, %v268, %v12
      %vm275 = vcmask 1046528
      %v276 = vsel %vm275, %v274, %v12
      %v277 = vrot.slane %v276, 7
      %s278 = scalar_lea.vmem [#allocation22], 4
      %v279 = vpack.c.bf16 0.0, %v277
      %s281 = ssub.s32 16, 1
      %282 = vst [vmem:[%s278] sm:%s281] %v279
      %s283 = scalar_lea.vmem %s211, 16
      %v284 = vld [vmem:[%s283] sm:$0xf]
      %v285 = vunpack.c.l.bf16 %v284
      %v286 = vunpack.c.h.bf16 %v284
      %v287 = vlaneseq
      %v288 = vand.u32 %v287, 127
      %vm290 = vcmp.lt.s32.totalorder %v288, 192
      %v291 = vsel %vm290, %v285, %v12
      %vm292 = vcmask 1046528
      %v293 = vsel %vm292, %v291, %v237
      %v294 = vrot.slane %v293, 7
      %s295 = scalar_lea.vmem [#allocation22], 8
      %v296 = vpack.c.bf16 0.0, %v294
      %s298 = ssub.s32 16, 1
      %299 = vst [vmem:[%s295] sm:%s298] %v296
      %s300 = scalar_lea.vmem %s211, 20
      %s302 = sor.u32 255, 127
      %s303 = sand.u32 %s302, 85
      %s304 = sshrl.u32 %s303, 1
      %s305 = sor.u32 %s303, %s304
      %s306 = sand.u32 51, %s305
      %s307 = sshrl.u32 %s306, 2
      %s308 = sor.u32 %s306, %s307
      %s309 = sand.u32 15, %s308
      %v310 = vld [vmem:[%s300] sm:%s309]
      %v311 = vunpack.c.l.bf16 %v310
      %v312 = vunpack.c.h.bf16 %v310
      %v313 = vlaneseq
      %v314 = vand.u32 %v313, 127
      %v315 = vadd.s32 %v314, 128
      %vm316 = vcmp.lt.s32.totalorder %v315, 192
      %v317 = vsel %vm316, %v311, %v12
      %vm318 = vcmask 1046528
      %v319 = vsel %vm318, %v317, %v274
      %v320 = vrot.slane %v319, 7
      %s321 = scalar_lea.vmem [#allocation22], 12
      %v322 = vpack.c.bf16 0.0, %v320
      %s324 = ssub.s32 16, 1
      %325 = vst [vmem:[%s321] sm:%s324] %v322
      %vm326 = vcmask 1046528
      %v327 = vsel %vm326, %v12, %v291
      %v328 = vrot.slane %v327, 7
      %s329 = scalar_lea.vmem [#allocation22], 16
      %v330 = vpack.c.bf16 0.0, %v328
      %s332 = ssub.s32 16, 1
      %333 = vst [vmem:[%s329] sm:%s332] %v330
      %vm334 = vcmask 1046528
      %v335 = vsel %vm334, %v12, %v317
      %v336 = vrot.slane %v335, 7
      %s337 = scalar_lea.vmem [#allocation22], 20
      %v338 = vpack.c.bf16 0.0, %v336
      %s340 = ssub.s32 16, 1
      %341 = vst [vmem:[%s337] sm:%s340] %v338
      %v342 = vld [vmem:[%s0] sm:$0xf]
      %v343 = vunpack.c.l.bf16 %v342
      %v344 = vunpack.c.h.bf16 %v342
      %v345 = vpack.c.bf16 0.0, %v343
      %s347 = ssub.s32 16, 1
      %348 = vst [vmem:[#allocation23] sm:%s347] %v345
      %s349 = scalar_lea.vmem %s0, 4
      %v350 = vld [vmem:[%s349] sm:$0xf]
      %v351 = vunpack.c.l.bf16 %v350
      %v352 = vunpack.c.h.bf16 %v350
      %s353 = scalar_lea.vmem [#allocation23], 4
      %v354 = vpack.c.bf16 0.0, %v351
      %s356 = ssub.s32 16, 1
      %357 = vst [vmem:[%s353] sm:%s356] %v354
      %s358 = scalar_lea.vmem %s0, 8
      %v359 = vld [vmem:[%s358] sm:$0xf]
      %v360 = vunpack.c.l.bf16 %v359
      %v361 = vunpack.c.h.bf16 %v359
      %s362 = scalar_lea.vmem [#allocation23], 8
      %v363 = vpack.c.bf16 0.0, %v360
      %s365 = ssub.s32 16, 1
      %366 = vst [vmem:[%s362] sm:%s365] %v363
      %s367 = scalar_lea.vmem %s0, 12
      %v368 = vld [vmem:[%s367] sm:$0xf]
      %v369 = vunpack.c.l.bf16 %v368
      %v370 = vunpack.c.h.bf16 %v368
      %s371 = scalar_lea.vmem [#allocation23], 12
      %v372 = vpack.c.bf16 0.0, %v369
      %s374 = ssub.s32 16, 1
      %375 = vst [vmem:[%s371] sm:%s374] %v372
      %s376 = scalar_lea.vmem %s0, 16
      %v377 = vld [vmem:[%s376] sm:$0xf]
      %v378 = vunpack.c.l.bf16 %v377
      %v379 = vunpack.c.h.bf16 %v377
      %s380 = scalar_lea.vmem [#allocation23], 16
      %v381 = vpack.c.bf16 0.0, %v378
      %s383 = ssub.s32 16, 1
      %384 = vst [vmem:[%s380] sm:%s383] %v381
      %s385 = scalar_lea.vmem %s0, 20
      %v386 = vld [vmem:[%s385] sm:$0xf]
      %v387 = vunpack.c.l.bf16 %v386
      %v388 = vunpack.c.h.bf16 %v386
      %s389 = scalar_lea.vmem [#allocation23], 20
      %v390 = vpack.c.bf16 0.0, %v387
      %s392 = ssub.s32 16, 1
      %393 = vst [vmem:[%s389] sm:%s392] %v390
      %s394 = scalar_lea.vmem %s0, 24
      %v395 = vld [vmem:[%s394] sm:$0xf]
      %v396 = vunpack.c.l.bf16 %v395
      %v397 = vunpack.c.h.bf16 %v395
      %s398 = scalar_lea.vmem [#allocation23], 24
      %v399 = vpack.c.bf16 0.0, %v396
      %s401 = ssub.s32 16, 1
      %402 = vst [vmem:[%s398] sm:%s401] %v399
      %s403 = scalar_lea.vmem %s0, 28
      %v404 = vld [vmem:[%s403] sm:$0xf]
      %v405 = vunpack.c.l.bf16 %v404
      %v406 = vunpack.c.h.bf16 %v404
      %s407 = scalar_lea.vmem [#allocation23], 28
      %v408 = vpack.c.bf16 0.0, %v405
      %s410 = ssub.s32 16, 1
      %411 = vst [vmem:[%s407] sm:%s410] %v408
      %s412 = scalar_lea.vmem %s0, 32
      %v413 = vld [vmem:[%s412] sm:$0xf]
      %v414 = vunpack.c.l.bf16 %v413
      %v415 = vunpack.c.h.bf16 %v413
      %s416 = scalar_lea.vmem [#allocation23], 32
      %v417 = vpack.c.bf16 0.0, %v414
      %s419 = ssub.s32 16, 1
      %420 = vst [vmem:[%s416] sm:%s419] %v417
      %s421 = scalar_lea.vmem %s0, 36
      %v422 = vld [vmem:[%s421] sm:$0xf]
      %v423 = vunpack.c.l.bf16 %v422
      %v424 = vunpack.c.h.bf16 %v422
      %s425 = scalar_lea.vmem [#allocation23], 36
      %v426 = vpack.c.bf16 0.0, %v423
      %s428 = ssub.s32 16, 1
      %429 = vst [vmem:[%s425] sm:%s428] %v426
      %s430 = scalar_lea.vmem %s0, 40
      %v431 = vld [vmem:[%s430] sm:$0xf]
      %v432 = vunpack.c.l.bf16 %v431
      %v433 = vunpack.c.h.bf16 %v431
      %s434 = scalar_lea.vmem [#allocation23], 40
      %v435 = vpack.c.bf16 0.0, %v432
      %s437 = ssub.s32 16, 1
      %438 = vst [vmem:[%s434] sm:%s437] %v435
      %s439 = scalar_lea.vmem %s0, 44
      %v440 = vld [vmem:[%s439] sm:$0xf]
      %v441 = vunpack.c.l.bf16 %v440
      %v442 = vunpack.c.h.bf16 %v440
      %s443 = scalar_lea.vmem [#allocation23], 44
      %v444 = vpack.c.bf16 0.0, %v441
      %s446 = ssub.s32 16, 1
      %447 = vst [vmem:[%s443] sm:%s446] %v444
      %s448 = scalar_lea.vmem %s0, 48
      %v449 = vld [vmem:[%s448] sm:$0xf]
      %v450 = vunpack.c.l.bf16 %v449
      %v451 = vunpack.c.h.bf16 %v449
      %s452 = scalar_lea.vmem [#allocation23], 48
      %v453 = vpack.c.bf16 0.0, %v450
      %s455 = ssub.s32 16, 1
      %456 = vst [vmem:[%s452] sm:%s455] %v453
      %s457 = scalar_lea.vmem %s0, 52
      %v458 = vld [vmem:[%s457] sm:$0xf]
      %v459 = vunpack.c.l.bf16 %v458
      %v460 = vunpack.c.h.bf16 %v458
      %s461 = scalar_lea.vmem [#allocation23], 52
      %v462 = vpack.c.bf16 0.0, %v459
      %s464 = ssub.s32 16, 1
      %465 = vst [vmem:[%s461] sm:%s464] %v462
      %s466 = scalar_lea.vmem %s0, 56
      %v467 = vld [vmem:[%s466] sm:$0xf]
      %v468 = vunpack.c.l.bf16 %v467
      %v469 = vunpack.c.h.bf16 %v467
      %s470 = scalar_lea.vmem [#allocation23], 56
      %v471 = vpack.c.bf16 0.0, %v468
      %s473 = ssub.s32 16, 1
      %474 = vst [vmem:[%s470] sm:%s473] %v471
      %s475 = scalar_lea.vmem %s0, 60
      %v476 = vld [vmem:[%s475] sm:$0xf]
      %v477 = vunpack.c.l.bf16 %v476
      %v478 = vunpack.c.h.bf16 %v476
      %s479 = scalar_lea.vmem [#allocation23], 60
      %v480 = vpack.c.bf16 0.0, %v477
      %s482 = ssub.s32 16, 1
      %483 = vst [vmem:[%s479] sm:%s482] %v480
      %s484 = scalar_lea.vmem %s0, 64
      %s486 = sor.u32 255, 127
      %s487 = sand.u32 %s486, 85
      %s488 = sshrl.u32 %s487, 1
      %s489 = sor.u32 %s487, %s488
      %s490 = sand.u32 51, %s489
      %s491 = sshrl.u32 %s490, 2
      %s492 = sor.u32 %s490, %s491
      %s493 = sand.u32 15, %s492
      %v494 = vld [vmem:[%s484] sm:%s493]
      %v495 = vunpack.c.l.bf16 %v494
      %v496 = vunpack.c.h.bf16 %v494
      %s497 = scalar_lea.vmem [#allocation23], 64
      %v498 = vpack.c.bf16 0.0, %v495
      %s500 = ssub.s32 16, 1
      %501 = vst [vmem:[%s497] sm:%s500] %v498
      %s502 = scalar_lea.vmem %s0, 68
      %s504 = sor.u32 255, 127
      %s505 = sand.u32 %s504, 85
      %s506 = sshrl.u32 %s505, 1
      %s507 = sor.u32 %s505, %s506
      %s508 = sand.u32 51, %s507
      %s509 = sshrl.u32 %s508, 2
      %s510 = sor.u32 %s508, %s509
      %s511 = sand.u32 15, %s510
      %v512 = vld [vmem:[%s502] sm:%s511]
      %v513 = vunpack.c.l.bf16 %v512
      %v514 = vunpack.c.h.bf16 %v512
      %s515 = scalar_lea.vmem [#allocation23], 68
      %v516 = vpack.c.bf16 0.0, %v513
      %s518 = ssub.s32 16, 1
      %519 = vst [vmem:[%s515] sm:%s518] %v516
      %s520 = scalar_lea.vmem %s0, 72
      %s522 = sor.u32 255, 127
      %s523 = sand.u32 %s522, 85
      %s524 = sshrl.u32 %s523, 1
      %s525 = sor.u32 %s523, %s524
      %s526 = sand.u32 51, %s525
      %s527 = sshrl.u32 %s526, 2
      %s528 = sor.u32 %s526, %s527
      %s529 = sand.u32 15, %s528
      %v530 = vld [vmem:[%s520] sm:%s529]
      %v531 = vunpack.c.l.bf16 %v530
      %v532 = vunpack.c.h.bf16 %v530
      %s533 = scalar_lea.vmem [#allocation23], 72
      %v534 = vpack.c.bf16 0.0, %v531
      %s536 = ssub.s32 16, 1
      %537 = vst [vmem:[%s533] sm:%s536] %v534
      %s538 = scalar_lea.vmem %s0, 76
      %s540 = sor.u32 255, 127
      %s541 = sand.u32 %s540, 85
      %s542 = sshrl.u32 %s541, 1
      %s543 = sor.u32 %s541, %s542
      %s544 = sand.u32 51, %s543
      %s545 = sshrl.u32 %s544, 2
      %s546 = sor.u32 %s544, %s545
      %s547 = sand.u32 15, %s546
      %v548 = vld [vmem:[%s538] sm:%s547]
      %v549 = vunpack.c.l.bf16 %v548
      %v550 = vunpack.c.h.bf16 %v548
      %s551 = scalar_lea.vmem [#allocation23], 76
      %v552 = vpack.c.bf16 0.0, %v549
      %s554 = ssub.s32 16, 1
      %555 = vst [vmem:[%s551] sm:%s554] %v552
      %s556 = scalar_lea.vmem %s0, 80
      %s558 = sor.u32 255, 127
      %s559 = sand.u32 %s558, 85
      %s560 = sshrl.u32 %s559, 1
      %s561 = sor.u32 %s559, %s560
      %s562 = sand.u32 51, %s561
      %s563 = sshrl.u32 %s562, 2
      %s564 = sor.u32 %s562, %s563
      %s565 = sand.u32 15, %s564
      %v566 = vld [vmem:[%s556] sm:%s565]
      %v567 = vunpack.c.l.bf16 %v566
      %v568 = vunpack.c.h.bf16 %v566
      %s569 = scalar_lea.vmem [#allocation23], 80
      %v570 = vpack.c.bf16 0.0, %v567
      %s572 = ssub.s32 16, 1
      %573 = vst [vmem:[%s569] sm:%s572] %v570
      %s574 = scalar_lea.vmem %s0, 84
      %s576 = sor.u32 255, 127
      %s577 = sand.u32 %s576, 85
      %s578 = sshrl.u32 %s577, 1
      %s579 = sor.u32 %s577, %s578
      %s580 = sand.u32 51, %s579
      %s581 = sshrl.u32 %s580, 2
      %s582 = sor.u32 %s580, %s581
      %s583 = sand.u32 15, %s582
      %v584 = vld [vmem:[%s574] sm:%s583]
      %v585 = vunpack.c.l.bf16 %v584
      %v586 = vunpack.c.h.bf16 %v584
      %s587 = scalar_lea.vmem [#allocation23], 84
      %v588 = vpack.c.bf16 0.0, %v585
      %s590 = ssub.s32 16, 1
      %591 = vst [vmem:[%s587] sm:%s590] %v588
      %s592 = scalar_lea.vmem %s0, 88
      %s594 = sor.u32 255, 127
      %s595 = sand.u32 %s594, 85
      %s596 = sshrl.u32 %s595, 1
      %s597 = sor.u32 %s595, %s596
      %s598 = sand.u32 51, %s597
      %s599 = sshrl.u32 %s598, 2
      %s600 = sor.u32 %s598, %s599
      %s601 = sand.u32 15, %s600
      %v602 = vld [vmem:[%s592] sm:%s601]
      %v603 = vunpack.c.l.bf16 %v602
      %v604 = vunpack.c.h.bf16 %v602
      %s605 = scalar_lea.vmem [#allocation23], 88
      %v606 = vpack.c.bf16 0.0, %v603
      %s608 = ssub.s32 16, 1
      %609 = vst [vmem:[%s605] sm:%s608] %v606
      %s610 = scalar_lea.vmem %s0, 92
      %s612 = sor.u32 255, 127
      %s613 = sand.u32 %s612, 85
      %s614 = sshrl.u32 %s613, 1
      %s615 = sor.u32 %s613, %s614
      %s616 = sand.u32 51, %s615
      %s617 = sshrl.u32 %s616, 2
      %s618 = sor.u32 %s616, %s617
      %s619 = sand.u32 15, %s618
      %v620 = vld [vmem:[%s610] sm:%s619]
      %v621 = vunpack.c.l.bf16 %v620
      %v622 = vunpack.c.h.bf16 %v620
      %s623 = scalar_lea.vmem [#allocation23], 92
      %v624 = vpack.c.bf16 0.0, %v621
      %s626 = ssub.s32 16, 1
      %627 = vst [vmem:[%s623] sm:%s626] %v624
      %s628 = scalar_lea.vmem [#allocation23], 96
      %v629 = vpack.c.bf16 0.0, %v17
      %s631 = ssub.s32 16, 1
      %632 = vst [vmem:[%s628] sm:%s631] %v629
      %s633 = scalar_lea.vmem [#allocation23], 100
      %v634 = vpack.c.bf16 0.0, %v17
      %s636 = ssub.s32 16, 1
      %637 = vst [vmem:[%s633] sm:%s636] %v634
      %s638 = scalar_lea.vmem [#allocation23], 104
      %v639 = vpack.c.bf16 0.0, %v17
      %s641 = ssub.s32 16, 1
      %642 = vst [vmem:[%s638] sm:%s641] %v639
      %s643 = scalar_lea.vmem [#allocation23], 108
      %v644 = vpack.c.bf16 0.0, %v17
      %s646 = ssub.s32 16, 1
      %647 = vst [vmem:[%s643] sm:%s646] %v644
      %s648 = scalar_lea.vmem [#allocation23], 112
      %v649 = vpack.c.bf16 0.0, %v17
      %s651 = ssub.s32 16, 1
      %652 = vst [vmem:[%s648] sm:%s651] %v649
      %s653 = scalar_lea.vmem [#allocation23], 116
      %v654 = vpack.c.bf16 0.0, %v17
      %s656 = ssub.s32 16, 1
      %657 = vst [vmem:[%s653] sm:%s656] %v654
      %s658 = scalar_lea.vmem [#allocation23], 120
      %v659 = vpack.c.bf16 0.0, %v17
      %s661 = ssub.s32 16, 1
      %662 = vst [vmem:[%s658] sm:%s661] %v659
      %s663 = scalar_lea.vmem [#allocation23], 124
      %v664 = vpack.c.bf16 0.0, %v17
      %s666 = ssub.s32 16, 1
      %667 = vst [vmem:[%s663] sm:%s666] %v664
      %s668 = scalar_lea.vmem %s212, 8
      %v669 = vld [vmem:[%s668] sm:$0xff]
      %vm670 = vcmask 1046528
      %v671 = vsel %vm670, %v669, %v21
      %v672 = vrot.slane %v671, 7
      %v673 = vld [vmem:[%s5] sm:$0x1]
      %v674 = vlaneseq
      %v675 = vshrl.u32 %v674, 7
      %vm677 = vcmp.lt.s32.totalorder %v675, 1
      %v678 = vsel %vm677, %v673, %v22
      %679 = xla_tuple %v678, %v672
      %680 = xla_tuple %679
      %v681 = vmax.f32 %v678, %v672
      %682 = xla_tuple %v681
      %s684 = ssub.s32 256, 1
      %685 = vst [vmem:[#allocation24] sm:%s684] %v681
      %s686 = scalar_lea.vmem %s212, 16
      %v687 = vld [vmem:[%s686] sm:$0xff]
      %vm688 = vcmask 1046528
      %v689 = vsel %vm688, %v687, %v669
      %v690 = vrot.slane %v689, 7
      %691 = xla_tuple %v22, %v690
      %692 = xla_tuple %691
      %v693 = vmax.f32 %v22, %v690
      %694 = xla_tuple %v693
      %s695 = scalar_lea.vmem [#allocation24], 8
      %s697 = ssub.s32 256, 1
      %698 = vst [vmem:[%s695] sm:%s697] %v693
      %vm699 = vcmask 1046528
      %v700 = vsel %vm699, %v21, %v687
      %v701 = vrot.slane %v700, 7
      %702 = xla_tuple %v22, %v701
      %703 = xla_tuple %702
      %v704 = vmax.f32 %v22, %v701
      %705 = xla_tuple %v704
      %s706 = scalar_lea.vmem [#allocation24], 16
      %s708 = ssub.s32 256, 1
      %709 = vst [vmem:[%s706] sm:%s708] %v704
      %v710 = vld [vmem:[#allocation22] sm:$0xff]
      %v711 = vld [vmem:[#allocation22 + $0x8] sm:$0xff]
      %v712 = vld [vmem:[#allocation22 + $0x10] sm:$0x11]
      %v713 = vld [vmem:[#allocation23] sm:$0xf]
      %v714 = vld [vmem:[#allocation23 + $0x4] sm:$0xf]
      %v715 = vld [vmem:[#allocation23 + $0x8] sm:$0xf]
      %v716 = vld [vmem:[#allocation23 + $0xc] sm:$0xf]
      %v717 = vld [vmem:[#allocation23 + $0x10] sm:$0xf]
      %v718 = vld [vmem:[#allocation23 + $0x14] sm:$0xf]
      %v719 = vld [vmem:[#allocation23 + $0x18] sm:$0xf]
      %v720 = vld [vmem:[#allocation23 + $0x1c] sm:$0xf]
      %v721 = vld [vmem:[#allocation23 + $0x20] sm:$0xf]
      %v722 = vld [vmem:[#allocation23 + $0x24] sm:$0xf]
      %v723 = vld [vmem:[#allocation23 + $0x28] sm:$0xf]
      %v724 = vld [vmem:[#allocation23 + $0x2c] sm:$0xf]
      %v725 = vld [vmem:[#allocation23 + $0x30] sm:$0xf]
      %v726 = vld [vmem:[#allocation23 + $0x34] sm:$0xf]
      %v727 = vld [vmem:[#allocation23 + $0x38] sm:$0xf]
      %v728 = vld [vmem:[#allocation23 + $0x3c] sm:$0xf]
      %v729 = vld [vmem:[#allocation23 + $0x40] sm:$0xf]
      %v730 = vld [vmem:[#allocation23 + $0x44] sm:$0xf]
      %v731 = vld [vmem:[#allocation23 + $0x48] sm:$0xf]
      %v732 = vld [vmem:[#allocation23 + $0x4c] sm:$0xf]
      %v733 = vld [vmem:[#allocation23 + $0x50] sm:$0xf]
      %v734 = vld [vmem:[#allocation23 + $0x54] sm:$0xf]
      %v735 = vld [vmem:[#allocation23 + $0x58] sm:$0xf]
      %v736 = vld [vmem:[#allocation23 + $0x5c] sm:$0xf]
      %v737 = vld [vmem:[#allocation23 + $0x60] sm:$0xf]
      %v738 = vld [vmem:[#allocation23 + $0x64] sm:$0xf]
      %v739 = vld [vmem:[#allocation23 + $0x68] sm:$0xf]
      %v740 = vld [vmem:[#allocation23 + $0x6c] sm:$0xf]
      %v741 = vld [vmem:[#allocation23 + $0x70] sm:$0xf]
      %v742 = vld [vmem:[#allocation23 + $0x74] sm:$0xf]
      %v743 = vld [vmem:[#allocation23 + $0x78] sm:$0xf]
      %v744 = vld [vmem:[#allocation23 + $0x7c] sm:$0xf]
      %v745 = vld [vmem:[#allocation24] sm:$0xff]
      %v746 = vld [vmem:[#allocation24 + $0x8] sm:$0xff]
      %v747 = vld [vmem:[#allocation24 + $0x10] sm:$0x1]
      %v751 = vunpack.c.l.b16 %v710
      %v752 = vunpack.c.h.b16 %v710
      %v753 = vunpack.c.l.b16 %v711
      %v754 = vunpack.c.h.b16 %v711
      %v755 = vunpack.c.l.b16 %v712
      %v756 = vunpack.c.h.b16 %v712
      %v757 = vpack.c.b16 %v753, %v751
      %v758 = vpack.c.b16 %v754, %v752
      %v759 = vpack.c.b16 %v755, %v755
      %v760 = vpack.c.b16 %v756, %v756
      %v797 = vunpack.c.l.b16 %v713
      %v798 = vunpack.c.l.b16 %v714
      %v799 = vunpack.c.l.b16 %v715
      %v800 = vunpack.c.l.b16 %v716
      %v801 = vunpack.c.l.b16 %v717
      %v802 = vunpack.c.l.b16 %v718
      %v803 = vunpack.c.l.b16 %v719
      %v804 = vunpack.c.l.b16 %v720
      %v805 = vunpack.c.l.b16 %v721
      %v806 = vunpack.c.l.b16 %v722
      %v807 = vunpack.c.l.b16 %v723
      %v808 = vunpack.c.l.b16 %v724
      %v809 = vunpack.c.l.b16 %v725
      %v810 = vunpack.c.l.b16 %v726
      %v811 = vunpack.c.l.b16 %v727
      %v812 = vunpack.c.l.b16 %v728
      %v813 = vunpack.c.l.b16 %v729
      %v814 = vunpack.c.l.b16 %v730
      %v815 = vunpack.c.l.b16 %v731
      %v816 = vunpack.c.l.b16 %v732
      %v817 = vunpack.c.l.b16 %v733
      %v818 = vunpack.c.l.b16 %v734
      %v819 = vunpack.c.l.b16 %v735
      %v820 = vunpack.c.l.b16 %v736
      %v821 = vunpack.c.l.b16 %v737
      %v822 = vunpack.c.l.b16 %v738
      %v823 = vunpack.c.l.b16 %v739
      %v824 = vunpack.c.l.b16 %v740
      %v825 = vunpack.c.l.b16 %v741
      %v826 = vunpack.c.l.b16 %v742
      %v827 = vunpack.c.l.b16 %v743
      %v828 = vunpack.c.l.b16 %v744
      %v829 = vpack.c.b16 %v798, %v797
      %v830 = vpack.c.b16 %v800, %v799
      %v831 = vpack.c.b16 %v802, %v801
      %v832 = vpack.c.b16 %v804, %v803
      %v833 = vpack.c.b16 %v806, %v805
      %v834 = vpack.c.b16 %v808, %v807
      %v835 = vpack.c.b16 %v810, %v809
      %v836 = vpack.c.b16 %v812, %v811
      %v837 = vpack.c.b16 %v814, %v813
      %v838 = vpack.c.b16 %v816, %v815
      %v839 = vpack.c.b16 %v818, %v817
      %v840 = vpack.c.b16 %v820, %v819
      %v841 = vpack.c.b16 %v822, %v821
      %v842 = vpack.c.b16 %v824, %v823
      %v843 = vpack.c.b16 %v826, %v825
      %v844 = vpack.c.b16 %v828, %v827
      %861 = vmatpush.bf16.msra.mxu0 %v836
      %862 = vmatpush.bf16.msra.mxu0 %v835
      %863 = vmatpush.bf16.msra.mxu0 %v834
      %864 = vmatpush.bf16.msra.mxu0 %v833
      %865 = vmatpush.bf16.msra.mxu0 %v832
      %866 = vmatpush.bf16.msra.mxu0 %v831
      %867 = vmatpush.bf16.msra.mxu0 %v830
      %868 = vmatpush.bf16.msra.mxu0 %v829
      %869 = vmatmul.bf16.gmra.mxu0 %v757
      %v870 = vpop.f32.mrf.mxu0
      %v871 = vadd.f32 %v745, %v870
      %v872 = vpop.f32.mrf.mxu0
      %v873 = vadd.f32 %v746, %v872
      %874 = vmatmul.bf16.gmra.mxu0 %v759
      %v875 = vpop.f32.mrf.mxu0
      %v876 = vadd.f32 %v747, %v875
      %v877 = vpop.f32.mrf.mxu0
      %878 = vdwg.mxu0
      %879 = vmatpush.bf16.msra.mxu0 %v844
      %880 = vmatpush.bf16.msra.mxu0 %v843
      %881 = vmatpush.bf16.msra.mxu0 %v842
      %882 = vmatpush.bf16.msra.mxu0 %v841
      %883 = vmatpush.bf16.msra.mxu0 %v840
      %884 = vmatpush.bf16.msra.mxu0 %v839
      %885 = vmatpush.bf16.msra.mxu0 %v838
      %886 = vmatpush.bf16.msra.mxu0 %v837
      %887 = vmatmul.bf16.gmra.mxu0 %v758
      %v888 = vpop.f32.mrf.mxu0
      %v889 = vadd.f32 %v871, %v888
      %v890 = vpop.f32.mrf.mxu0
      %v891 = vadd.f32 %v873, %v890
      %892 = vmatmul.bf16.gmra.mxu0 %v760
      %v893 = vpop.f32.mrf.mxu0
      %v894 = vadd.f32 %v876, %v893
      %v895 = vpop.f32.mrf.mxu0
      %896 = vdwg.mxu0
      %897 = vst [vmem:[%s217] sm:$0xff] %v889
      %898 = vst [vmem:[%s217 + $0x8] sm:$0xff] %v891
      %899 = vst [vmem:[%s217 + $0x10] sm:$0x1] %v894
      %p900 = scmp.lt.s32.totalorder %s29, 1
      %s901 = scalar_select %p900, %s29, 1
      %s902 = smul.addr %s901, 3
      %s903 = smul.addr %s902, 8
      %s904 = scalar_lea.vmem %s6, %s903
      // Predicated region
      $region37: #{embedding_forward.2} parent=35 // pred_check
        %p905 = pneg %p136
      $region38: #{embedding_forward.2} parent=35 // pred_check_branch
        %907 = sbr.rel (%p905) target = $region40
      $region39: #{embedding_forward.2} parent=35 // pred_region
        _
      $region40: #{embedding_forward.2} parent=35 // pred_fallthru
        _
    $region36: #{embedding_forward.2} parent=5 // pred_fallthru
      _
    %p908 = scmp.le.s32.totalorder 2, %s24
    // Predicated region
    $region41: #{embedding_forward.2} parent=5 // pred_check
      %p909 = pneg %p908
    $region42: #{embedding_forward.2} parent=5 // pred_check_branch
      %911 = sbr.rel (%p909) target = $region44
    $region43: #{embedding_forward.2} parent=5 // pred_region
      %s912 = ssub.s32 %s24, 2
      // Predicated region
      $region45: #{embedding_forward.2} parent=43 // pred_check
        %p913 = pneg %p142
      $region46: #{embedding_forward.2} parent=43 // pred_check_branch
        %915 = sbr.rel (%p913) target = $region48
      $region47: #{embedding_forward.2} parent=43 // pred_region
        %p916 = scmp.lt.s32.totalorder %s30, 1
        %s917 = scalar_select %p916, %s30, 1
        %s918 = smul.addr %s917, 3
        %s919 = smul.addr %s918, 8
        %s920 = scalar_lea.vmem %s6, %s919
      $region48: #{embedding_forward.2} parent=43 // pred_fallthru
        _
    $region44: #{embedding_forward.2} parent=5 // pred_fallthru
      _
  $region6: #{embedding_forward.2} parent=0 // loop_footer
    %s28 = sadd.s32 1, %s24
  $region7: #{embedding_forward.2} parent=0 // loop_footer_branch
    %23 = sbr.rel target = $region3
  $region8: #{embedding_forward.2} parent=0 // loop_exit
    _

</llo_original>
